<compile_context>
chip_gen: v5e
topology: v5e:2x2
jax: 0.10.0
libtpu: 0.0.40
codegen_flags: <defaults>
</compile_context>

<pallas_src>
import functools

import jax
import jax.numpy as jnp
from jax.experimental import pallas as pl
from jax.experimental.pallas import tpu as pltpu


def _kd_loss_kernel(stu_ref, tea_ref, out_ref, *, inv_t, batch_size, tile_rows):
    """Computes one batch tile's partial KL(teacher || student) sum.

    The scalar partial is written at [0, 0] of a lane-dense (8, 128) output
    block (zeros elsewhere); the wrapper sums all partials.
    """
    i = pl.program_id(0)

    # Upcast (inputs may be bf16) and scale by 1/T via multiply.
    stu = stu_ref[...].astype(jnp.float32) * inv_t
    tea = tea_ref[...].astype(jnp.float32) * inv_t

    # Student: only the per-row log-sum-exp is needed (log_s never materialized).
    s_max = jnp.max(stu, axis=-1, keepdims=True)
    s_shift = stu - s_max
    s_lse = jnp.log(jnp.sum(jnp.exp(s_shift), axis=-1, keepdims=True))

    # Teacher: unnormalized exp + row sum (normalization deferred to per-row).
    t_max = jnp.max(tea, axis=-1, keepdims=True)
    t_shift = tea - t_max
    t_exp = jnp.exp(t_shift)
    t_sum = jnp.sum(t_exp, axis=-1, keepdims=True)

    # KL_row = sum_c softmax(tea)[c] * (log_softmax(tea)[c] - log_softmax(stu)[c])
    #        = [sum_c t_exp * (t_shift - s_shift)] / t_sum + (s_lse - log t_sum)
    # (uses sum_c t_exp = t_sum; avoids broadcasting log-probs over the lane axis)
    dotsum = jnp.sum(t_exp * (t_shift - s_shift), axis=-1, keepdims=True)
    row_kl = dotsum * pl.reciprocal(t_sum, approx=False) + (s_lse - jnp.log(t_sum))

    # Mask padded rows of a ragged last tile (their contents are garbage;
    # jnp.where selects 0.0 for them even if row_kl is NaN/Inf there).
    row_idx = i * tile_rows + jax.lax.broadcasted_iota(jnp.int32, row_kl.shape, 0)
    row_kl = jnp.where(row_idx < batch_size, row_kl, 0.0)

    tile_kl = jnp.sum(row_kl)

    # Lane-dense (8, 128) partial-output block: scalar at [0, 0], zeros elsewhere
    # (avoids masked sub-(8,128) stores).
    ri = jax.lax.broadcasted_iota(jnp.int32, (8, 128), 0)
    ci = jax.lax.broadcasted_iota(jnp.int32, (8, 128), 1)
    out_ref[...] = jnp.where((ri == 0) & (ci == 0), tile_kl, 0.0)


def kd_loss(stu_pred, tea_pred, temperature, *, tb=1024):
    """Pallas KDLoss: kl_div(log_softmax(stu/T), softmax(tea/T), 'sum') * T^2 / B.

    Accepts f32 or bf16 logits of shape (B, C); class axis (torch dim=1) maps
    to the TPU lane axis.
    """
    assert stu_pred.shape == tea_pred.shape
    B, C = stu_pred.shape

    # Batch-tile size: keep 2 inputs x 2 pipeline buffers within ~8 MiB so the
    # pipeline fits v5e's 16 MiB scoped default and v7x's smaller VMEM, while
    # tiles stay large enough to hide per-step overhead.
    itemsize = stu_pred.dtype.itemsize
    dma_budget = 8 * 1024 * 1024
    max_tb = max(8, (dma_budget // (4 * C * itemsize)) // 8 * 8)
    tb = min(tb, max_tb)
    if B <= tb:
        tb = B                       # single tile: full-dim block is always legal
    else:
        tb = max(8, (tb // 8) * 8)   # tiled sublane axis must be a multiple of 8
    num_tiles = pl.cdiv(B, tb)

    kernel = functools.partial(
        _kd_loss_kernel,
        inv_t=1.0 / float(temperature),
        batch_size=B,
        tile_rows=tb,
    )

    # TODO(synk): for vocab-scale C (>= ~32k) add class-axis tiling with an
    # online (flash-style) max/sum pass; currently full-C rows must fit in VMEM.
    partials = pl.pallas_call(
        kernel,
        out_shape=jax.ShapeDtypeStruct((8 * num_tiles, 128), jnp.float32),
        grid_spec=pltpu.PrefetchScalarGridSpec(
            num_scalar_prefetch=0,
            grid=(num_tiles,),
            in_specs=[
                pl.BlockSpec((tb, C), lambda i: (i, 0)),
                pl.BlockSpec((tb, C), lambda i: (i, 0)),
            ],
            out_specs=pl.BlockSpec((8, 128), lambda i: (i, 0)),
        ),
        compiler_params=pltpu.CompilerParams(
            dimension_semantics=("parallel",),
            vmem_limit_bytes=32 * 1024 * 1024,
        ),
    )(stu_pred, tea_pred)

    # Scale applied exactly once, outside the kernel.
    return jnp.sum(partials) * (float(temperature) ** 2) / B


def kd_loss_ref(stu_pred, tea_pred, temperature):
    """Pure-JAX reference for sanity checking."""
    stu = stu_pred.astype(jnp.float32)
    tea = tea_pred.astype(jnp.float32)
    s = jax.nn.log_softmax(stu / temperature, axis=1)
    t = jax.nn.softmax(tea / temperature, axis=1)
    log_t = jax.nn.log_softmax(tea / temperature, axis=1)
    kl = jnp.sum(t * (log_t - s))
    return kl * temperature ** 2 / stu_pred.shape[0]


if __name__ == "__main__":
    T = 4.0
    key = jax.random.PRNGKey(0)
    k1, k2, k3, k4 = jax.random.split(key, 4)

    # Test 1: small lane-dense shape, single batch tile.
    B1, C1 = 8, 128
    stu1 = jax.random.normal(k1, (B1, C1), dtype=jnp.float32)
    tea1 = jax.random.normal(k2, (B1, C1), dtype=jnp.float32)
    out1 = jax.block_until_ready(kd_loss(stu1, tea1, T))
    ref1 = jax.block_until_ready(kd_loss_ref(stu1, tea1, T))
    assert jnp.allclose(out1, ref1, rtol=1e-5, atol=1e-5), (out1, ref1)

    # Test 2: batch not a multiple of the tile -> exercises batch tiling,
    # pipelining, and ragged-last-tile masking.
    B2, C2 = 20, 128
    stu2 = jax.random.normal(k3, (B2, C2), dtype=jnp.float32)
    tea2 = jax.random.normal(k4, (B2, C2), dtype=jnp.float32)
    out2 = jax.block_until_ready(kd_loss(stu2, tea2, T, tb=8))
    ref2 = jax.block_until_ready(kd_loss_ref(stu2, tea2, T))
    assert jnp.allclose(out2, ref2, rtol=1e-5, atol=1e-5), (out2, ref2)

    # Test 3: bf16 logits accepted at the boundary (upcast happens in-kernel).
    out3 = jax.block_until_ready(
        kd_loss(stu1.astype(jnp.bfloat16), tea1.astype(jnp.bfloat16), T))
    ref3 = jax.block_until_ready(
        kd_loss_ref(stu1.astype(jnp.bfloat16), tea1.astype(jnp.bfloat16), T))
    assert jnp.allclose(out3, ref3, rtol=1e-3, atol=1e-3), (out3, ref3)

    print("KERNEL_OK")
</pallas_src>

<mosaic_0001>
module attributes {stable_mosaic.version = 11 : i64} {
  func.func @_kd_loss_kernel(%arg0: i32, %arg1: memref<8x128xf32, #tpu.memory_space<vmem>>, %arg2: memref<8x128xf32, #tpu.memory_space<vmem>>, %arg3: memref<8x128xf32, #tpu.memory_space<vmem>>) attributes {dimension_semantics = [#tpu.dimension_semantics<parallel>], iteration_bounds = array<i64: 1>, scalar_prefetch = 0 : i64, scratch_operands = 0 : i64, tpu.core_type = #tpu.core_type<tc>, window_params = [{transform_indices = @transform_0, window_bounds = array<i64: 8, 128>}, {transform_indices = @transform_1, window_bounds = array<i64: 8, 128>}, {transform_indices = @transform_2, window_bounds = array<i64: 8, 128>}]} {
    %c0 = arith.constant 0 : index
    %c0_0 = arith.constant 0 : index
    %0 = vector.load %arg1[%c0, %c0_0] : memref<8x128xf32, #tpu.memory_space<vmem>>, vector<8x128xf32>
    %cst = arith.constant 2.500000e-01 : f32
    %1 = vector.broadcast %cst : f32 to vector<8x128xf32>
    %2 = arith.mulf %0, %1 : vector<8x128xf32>
    %c0_1 = arith.constant 0 : index
    %c0_2 = arith.constant 0 : index
    %3 = vector.load %arg2[%c0_1, %c0_2] : memref<8x128xf32, #tpu.memory_space<vmem>>, vector<8x128xf32>
    %cst_3 = arith.constant 2.500000e-01 : f32
    %4 = vector.broadcast %cst_3 : f32 to vector<8x128xf32>
    %5 = arith.mulf %3, %4 : vector<8x128xf32>
    %cst_4 = arith.constant dense<0xFF800000> : vector<8xf32>
    %6 = vector.multi_reduction <maximumf>, %2, %cst_4 [1] : vector<8x128xf32> to vector<8xf32>
    %7 = vector.shape_cast %6 : vector<8xf32> to vector<8x1xf32>
    %8 = vector.broadcast %7 : vector<8x1xf32> to vector<8x128xf32>
    %9 = arith.subf %2, %8 : vector<8x128xf32>
    %10 = math.exp %9 : vector<8x128xf32>
    %cst_5 = arith.constant dense<0.000000e+00> : vector<8xf32>
    %11 = vector.multi_reduction <add>, %10, %cst_5 [1] : vector<8x128xf32> to vector<8xf32>
    %12 = vector.shape_cast %11 : vector<8xf32> to vector<8x1xf32>
    %13 = math.log %12 : vector<8x1xf32>
    %cst_6 = arith.constant dense<0xFF800000> : vector<8xf32>
    %14 = vector.multi_reduction <maximumf>, %5, %cst_6 [1] : vector<8x128xf32> to vector<8xf32>
    %15 = vector.shape_cast %14 : vector<8xf32> to vector<8x1xf32>
    %16 = vector.broadcast %15 : vector<8x1xf32> to vector<8x128xf32>
    %17 = arith.subf %5, %16 : vector<8x128xf32>
    %18 = math.exp %17 : vector<8x128xf32>
    %cst_7 = arith.constant dense<0.000000e+00> : vector<8xf32>
    %19 = vector.multi_reduction <add>, %18, %cst_7 [1] : vector<8x128xf32> to vector<8xf32>
    %20 = vector.shape_cast %19 : vector<8xf32> to vector<8x1xf32>
    %21 = arith.subf %17, %9 : vector<8x128xf32>
    %22 = arith.mulf %18, %21 : vector<8x128xf32>
    %cst_8 = arith.constant dense<0.000000e+00> : vector<8xf32>
    %23 = vector.multi_reduction <add>, %22, %cst_8 [1] : vector<8x128xf32> to vector<8xf32>
    %24 = vector.shape_cast %23 : vector<8xf32> to vector<8x1xf32>
    %25 = tpu.reciprocal %20 : vector<8x1xf32> -> vector<8x1xf32>
    %26 = arith.mulf %24, %25 : vector<8x1xf32>
    %27 = math.log %20 : vector<8x1xf32>
    %28 = arith.subf %13, %27 : vector<8x1xf32>
    %29 = arith.addf %26, %28 : vector<8x1xf32>
    %c8_i32 = arith.constant 8 : i32
    %30 = arith.muli %arg0, %c8_i32 : i32
    %31 = tpu.iota {dimensions = array<i32: 0>} : vector<8x1xi32>
    %32 = vector.broadcast %30 : i32 to vector<8x1xi32>
    %33 = arith.addi %32, %31 : vector<8x1xi32>
    %c8_i32_9 = arith.constant 8 : i32
    %34 = vector.broadcast %c8_i32_9 : i32 to vector<8x1xi32>
    %35 = arith.cmpi slt, %33, %34 : vector<8x1xi32>
    %cst_10 = arith.constant 0.000000e+00 : f32
    %36 = vector.broadcast %cst_10 : f32 to vector<8x1xf32>
    %37 = arith.select %35, %29, %36 : vector<8x1xi1>, vector<8x1xf32>
    %38 = vector.shape_cast %37 : vector<8x1xf32> to vector<1x8x1xf32>
    %cst_11 = arith.constant dense<0.000000e+00> : vector<1xf32>
    %39 = vector.multi_reduction <add>, %38, %cst_11 [1, 2] : vector<1x8x1xf32> to vector<1xf32>
    %40 = vector.shape_cast %39 : vector<1xf32> to vector<1x1x1xf32>
    %41 = vector.extract %40[0, 0, 0] : f32 from vector<1x1x1xf32>
    %42 = tpu.iota {dimensions = array<i32: 0>} : vector<8x128xi32>
    %43 = tpu.iota {dimensions = array<i32: 1>} : vector<8x128xi32>
    %c0_i32 = arith.constant 0 : i32
    %44 = vector.broadcast %c0_i32 : i32 to vector<8x128xi32>
    %45 = arith.cmpi eq, %42, %44 : vector<8x128xi32>
    %c0_i32_12 = arith.constant 0 : i32
    %46 = vector.broadcast %c0_i32_12 : i32 to vector<8x128xi32>
    %47 = arith.cmpi eq, %43, %46 : vector<8x128xi32>
    %48 = arith.andi %45, %47 : vector<8x128xi1>
    %cst_13 = arith.constant 0.000000e+00 : f32
    %49 = vector.broadcast %41 : f32 to vector<8x128xf32>
    %50 = vector.broadcast %cst_13 : f32 to vector<8x128xf32>
    %51 = arith.select %48, %49, %50 : vector<8x128xi1>, vector<8x128xf32>
    %c0_14 = arith.constant 0 : index
    %c0_15 = arith.constant 0 : index
    %52 = vector.load %arg3[%c0_14, %c0_15] : memref<8x128xf32, #tpu.memory_space<vmem>>, vector<8x128xf32>
    tpu.vector_store %arg3[%c0_14, %c0_15], %51 {strides = array<i32>} : memref<8x128xf32, #tpu.memory_space<vmem>>, vector<8x128xf32>,
    return
  }
  func.func @transform_0(%arg0: i32) -> (i32, i32) {
    %c0_i32 = arith.constant 0 : i32
    %c0_i32_0 = arith.constant 0 : i32
    return %arg0, %c0_i32 : i32, i32
  }
  func.func @transform_1(%arg0: i32) -> (i32, i32) {
    %c0_i32 = arith.constant 0 : i32
    %c0_i32_0 = arith.constant 0 : i32
    return %arg0, %c0_i32 : i32, i32
  }
  func.func @transform_2(%arg0: i32) -> (i32, i32) {
    %c0_i32 = arith.constant 0 : i32
    %c0_i32_0 = arith.constant 0 : i32
    return %arg0, %c0_i32 : i32, i32
  }
}

</mosaic_0001>

<llo_original>
// kernel: tpu_custom_call.1
$region0: #{tpu_custom_call.1}
  #allocation0 [shape = 'u32[]', space=smem, size = 0x4, offset = 0x4, fixed_abs, tag = 'smem constant byte address 0x4 - core index']
  #allocation1 [shape = 'u32[72,128]{1,0:T(1,128)}', space=vmem, size = 0x9000, scoped, tag = 'internal scratch']
  %s0 = inlined_call_operand.hbm [shape: f32[8,128], index: 0, kind: input, shape index: {}]
  %s1 = inlined_call_operand.hbm [shape: f32[8,128], index: 1, kind: input, shape index: {}]
  %s2 = inlined_call_operand.hbm [shape: f32[8,128], index: 2, kind: output, shape index: {}]
  %s3 = sld [smem:[#allocation0]]
  $region26: #{tpu_custom_call.1} parent=0
    _
  %s5 = ssub.s32 1, %s3
  %s6 = scalar_select 0, %s5, %s3
  $region1: #{tpu_custom_call.1} parent=0
    #allocation2 [shape = 'u8[4096]{0}', space=vmem, size = 0x1000, scoped, tag = 'input window, operand 0, single buffered']
    #allocation3 [shape = 's32[1]{0}', space=sflag, size = 0x4, scoped, tag = 'scoped memory for tpu_custom_call.1']
    #allocation4 [shape = 's32[1]{0}', space=sflag, size = 0x4, scoped, tag = 'scoped memory for tpu_custom_call.1']
    #allocation5 [shape = 'u8[4096]{0}', space=vmem, size = 0x1000, scoped, tag = 'input window, operand 1, single buffered']
    #allocation6 [shape = 's32[1]{0}', space=sflag, size = 0x4, scoped, tag = 'scoped memory for tpu_custom_call.1']
    #allocation7 [shape = 'u8[4096]{0}', space=vmem, size = 0x1000, scoped, tag = 'output window, operand 0, single buffered']
    %7 = vsyncpa [#allocation3], 0
    %8 = vsyncpa [#allocation6], 0
    %9 = vsyncpa [#allocation4], 0
    // Predicated region
    $region2: #{tpu_custom_call.1} parent=1 // pred_check
      _
    $region3: #{tpu_custom_call.1} parent=1 // pred_check_branch
      %11 = sbr.rel (0) target = $region5
    $region4: #{tpu_custom_call.1} parent=1 // pred_region
      %13 = vsyncadd [#allocation3], 0
      %s15 = sshll.u32 %s0, 4
      %s16 = int_to_ptr.hbm [resolvable:$true] %s15
      %s17 = sshll.u32 [#allocation2], 4
      %s18 = int_to_ptr.vmem [resolvable:$true] %s17
      %20 = dma.hbm_to_vmem [thread:$0]  %s16, 128, %s18, [#allocation3]
    $region5: #{tpu_custom_call.1} parent=1 // pred_fallthru
      _
    // Predicated region
    $region6: #{tpu_custom_call.1} parent=1 // pred_check
      _
    $region7: #{tpu_custom_call.1} parent=1 // pred_check_branch
      %22 = sbr.rel (0) target = $region9
    $region8: #{tpu_custom_call.1} parent=1 // pred_region
      %24 = vsyncadd [#allocation6], 0
      %s26 = sshll.u32 %s1, 4
      %s27 = int_to_ptr.hbm [resolvable:$true] %s26
      %s28 = sshll.u32 [#allocation5], 4
      %s29 = int_to_ptr.vmem [resolvable:$true] %s28
      %31 = dma.hbm_to_vmem [thread:$0]  %s27, 128, %s29, [#allocation6]
    $region9: #{tpu_custom_call.1} parent=1 // pred_fallthru
      _
    // Predicated region
    $region10: #{tpu_custom_call.1} parent=1 // pred_check
      _
    $region11: #{tpu_custom_call.1} parent=1 // pred_check_branch
      %33 = sbr.rel (0) target = $region13
    $region12: #{tpu_custom_call.1} parent=1 // pred_region
      %35 = dma.done [#allocation3], 128
    $region13: #{tpu_custom_call.1} parent=1 // pred_fallthru
      _
    // Predicated region
    $region14: #{tpu_custom_call.1} parent=1 // pred_check
      _
    $region15: #{tpu_custom_call.1} parent=1 // pred_check_branch
      %37 = sbr.rel (0) target = $region17
    $region16: #{tpu_custom_call.1} parent=1 // pred_region
      %39 = dma.done [#allocation6], 128
    $region17: #{tpu_custom_call.1} parent=1 // pred_fallthru
      _
    %v40 = vld [vmem:[#allocation2] sm:$0xff]
    %v41 = vmul.f32 %v40, 0.25
    %v42 = vld [vmem:[#allocation5] sm:$0xff]
    %v43 = vmul.f32 %v42, 0.25
    %44 = vmax.xlane.f32.xlu0 %v41
    %v45 = vpop.xlane.xlu0 %44
    %v46 = vsub.f32 %v41, %v45
    %v47 = vmul.f32 %v46, 1.442695
    %v48 = vpow.pop %v47
    %49 = vadd.xlane.f32.xlu0 %v48
    %v50 = vpop.xlane.xlu0 %49
    %v51 = vlog2.pop %v50
    %v52 = vmul.f32 %v51, 0.6931472
    %53 = vmax.xlane.f32.xlu0 %v43
    %v54 = vpop.xlane.xlu0 %53
    %v55 = vsub.f32 %v43, %v54
    %v56 = vmul.f32 %v55, 1.442695
    %v57 = vpow.pop %v56
    %58 = vadd.xlane.f32.xlu0 %v57
    %v59 = vpop.xlane.xlu0 %58
    %v60 = vsub.f32 %v55, %v46
    %v61 = vmul.f32 %v57, %v60
    %62 = vadd.xlane.f32.xlu0 %v61
    %v63 = vpop.xlane.xlu0 %62
    %v64 = vrcp.pop %v59
    %v65 = vmul.f32 %v59, %v64
    %v66 = vsub.f32 1.0, %v65
    %v67 = vmul.f32 %v64, %v66
    %v68 = vadd.f32 %v64, %v67
    %vm69 = vweird.f32 %v59
    %vm70 = vweird.f32 %v64
    %vm71 = vmor %vm69, %vm70
    %v72 = vsel %vm71, %v64, %v68
    %v73 = vand.u32 2147483647, %v59
    %vm74 = vcmp.eq.f32.partialorder %v73, 8.507059e+37
    %v75 = vand.u32 %v59, 2147483648
    %v76 = vor.u32 1.1754944e-38, %v75
    %v77 = vsel %vm74, %v76, %v72
    %v78 = vmul.f32 %v63, %v77
    %v79 = vlog2.pop %v59
    %v80 = vmul.f32 %v79, 0.6931472
    %v81 = vsub.f32 %v52, %v80
    %v82 = vadd.f32 %v78, %v81
    %s83 = smul.u32 0, 8
    %v84 = vlaneseq
    %v85 = vshrl.u32 %v84, 7
    %v86 = vstv %s83
    %v87 = vadd.s32 %v86, %v85
    %vm88 = vcmp.lt.s32.totalorder %v87, 8
    %v89 = vsel %vm88, %v82, 0.0
    %vm90 = vcmask 7168
    %v91 = vsel %vm90, %v89, 0.0
    %92 = vadd.xlane.f32.xlu0 %v91
    %v93 = vpop.xlane.xlu0 %92
    %v94 = vrot.slane %v93, 4
    %v95 = vadd.f32 %v93, %v94
    %v96 = vrot.slane %v95, 2
    %v97 = vadd.f32 %v95, %v96
    %v98 = vrot.slane %v97, 1
    %v99 = vadd.f32 %v97, %v98
    %s100 = vtos %v99
    %v101 = vlaneseq
    %v102 = vand.u32 %v101, 127
    %vm103 = vcmp.eq.s32.totalorder %v85, 0
    %vm104 = vcmp.eq.s32.totalorder %v102, 0
    %vm105 = vmand %vm103, %vm104
    %v106 = vstv %s100
    %v107 = vsel %vm105, %v106, 0.0
    %108 = vst [vmem:[#allocation7] sm:$0xff] %v107
    // Predicated region
    $region18: #{tpu_custom_call.1} parent=1 // pred_check
      _
    $region19: #{tpu_custom_call.1} parent=1 // pred_check_branch
      %110 = sbr.rel (0) target = $region21
    $region20: #{tpu_custom_call.1} parent=1 // pred_region
      %112 = vsyncadd [#allocation4], 0
      %s114 = sshll.u32 [#allocation7], 4
      %s115 = int_to_ptr.vmem [resolvable:$true] %s114
      %s116 = sshll.u32 %s2, 4
      %s117 = int_to_ptr.hbm [resolvable:$true] %s116
      %119 = dma.vmem_to_hbm [thread:$0]  %s115, 128, %s117, [#allocation4]
    $region21: #{tpu_custom_call.1} parent=1 // pred_fallthru
      _
    // Predicated region
    $region22: #{tpu_custom_call.1} parent=1 // pred_check
      _
    $region23: #{tpu_custom_call.1} parent=1 // pred_check_branch
      %121 = sbr.rel (0) target = $region25
    $region24: #{tpu_custom_call.1} parent=1 // pred_region
      %123 = dma.done [#allocation4], 128
    $region25: #{tpu_custom_call.1} parent=1 // pred_fallthru
      _
    %124 = vsyncpa [#allocation3], 1
    %125 = vsyncpa [#allocation6], 1
    %126 = vsyncpa [#allocation4], 1

</llo_original>
